<compile_context>
chip_gen: v7x
topology: tpu7x:2x2x1
jax: 0.10.0
libtpu: 0.0.40
codegen_flags: <defaults>
</compile_context>

<pallas_src>
import functools

import jax
import jax.numpy as jnp
from jax.experimental import pallas as pl
from jax.experimental.pallas import tpu as pltpu


# ----------------------------------------------------------------------------
# Kernel: one (batch, row-tile) step.
#   x_ref, g_ref : (F_l | F_g, rh*W) f32   full-res activations, tokens on lanes
#   k_ref        : (F_K, (rh//2)*W) f32    half-vertical-res (W already doubled)
#   w*_ref       : bf16 folded conv+BN weights; b_ref / bp_ref f32 folded biases
#   out_ref      : (F_l, rh*W) f32         x * psi, written in NCHW order
# ----------------------------------------------------------------------------
def _ga_kernel(x_ref, g_ref, k_ref, wx_ref, wg_ref, wk_ref, b_ref, wp_ref,
               bp_ref, out_ref, *, n_row_pairs, w):
    cdt = wx_ref.dtype                    # bf16 compute dtype for the MXU
    x = x_ref[...]                        # keep f32 x for the exact gate

    # Branch 1x1 convs (tiny K) as bf16 MXU matmuls into one f32 accumulator.
    a = jnp.dot(wx_ref[...], x.astype(cdt), preferred_element_type=jnp.float32)
    a += jnp.dot(wg_ref[...], g_ref[...].astype(cdt),
                 preferred_element_type=jnp.float32)

    # k branch at half vertical resolution: conv once, then duplicate each
    # W-wide chunk so it covers the two full-res rows it upsamples to
    # (2x nearest-neighbour along H).  Static lane slices + concat only.
    m_half = jnp.dot(wk_ref[...], k_ref[...].astype(cdt),
                     preferred_element_type=jnp.float32)
    pieces = []
    for i in range(n_row_pairs):
        chunk = m_half[:, i * w:(i + 1) * w]
        pieces.append(chunk)
        pieces.append(chunk)
    a += jnp.concatenate(pieces, axis=-1)

    a = jnp.maximum(a + b_ref[...], 0.0)                  # folded bias + ReLU

    # psi branch: 1x1 conv + bias + exact sigmoid (exp goes to the EUP slot).
    p = jnp.dot(wp_ref[...], a.astype(cdt),
                preferred_element_type=jnp.float32) + bp_ref[...]
    psi = 1.0 / (1.0 + jnp.exp(-p))

    out_ref[...] = (x * psi).astype(out_ref.dtype)        # lane-dense store


# ----------------------------------------------------------------------------
# Tile sizing helpers
# ----------------------------------------------------------------------------
def _vmem_capacity_bytes():
    try:
        return int(pltpu.get_tpu_info().vmem_capacity_bytes)
    except Exception:
        return 64 * 1024 * 1024           # conservative (v7x per-core VMEM)


def _target_tokens(F_l, F_g, F_K, F_int, vmem_bytes):
    """Largest full-res token tile that keeps double-buffered f32 I/O blocks
    plus the (F_int, tokens) f32 intermediates well under the VMEM budget."""
    per_token = 4 * (2 * (2 * F_l + F_g) + F_K) + 14 * F_int + 2 * (F_l + F_g)
    return max(256, min(int(0.4 * vmem_bytes) // max(per_token, 1), 8192))


def _pick_row_tile(H, W, target_tokens):
    """Rows per tile: even, divides H, and the flattened lane widths
    (rh*W for x/g/out, rh*W//2 for k) are multiples of 128 unless the block
    spans the full array extent (rh == H)."""
    cands = []
    for rh in range(2, H + 1, 2):
        if H % rh:
            continue
        if rh == H or (rh * W) % 256 == 0:
            cands.append(rh)
    if not cands:                         # H is always even (k is half-res)
        cands = [H]
    under = [r for r in cands if r * W <= target_tokens and r <= 128]
    return max(under) if under else min(cands)


# ----------------------------------------------------------------------------
# Parameter folding: conv(1x1) + eval-mode BN -> (scale-folded weight, bias)
#   conv: y = x @ W + b ;  BN: z = (y - mean)/sqrt(var+eps)*gamma + beta
#   =>    z = x @ (W*s) + (b - mean)*s + beta   with s = gamma/sqrt(var+eps)
# Weights are transposed for the channel-major matmul and cast to bf16
# (single-pass MXU); biases stay f32.  eps must match the PyTorch BN eps.
# ----------------------------------------------------------------------------
def fold_params(raw, eps=1e-5):
    def fold(p):
        s = p["gamma"] / jnp.sqrt(p["var"] + eps)
        w = (p["w"] * s[None, :]).T.astype(jnp.bfloat16)   # (C_out, C_in)
        b = (p["b"] - p["mean"]) * s + p["beta"]
        return w, b

    wx, bx = fold(raw["Wx"])
    wg, bg = fold(raw["Wg"])
    wk, bk = fold(raw["Wj"])
    wp, bp = fold(raw["psi"])
    return dict(wx_t=wx, wg_t=wg, wk_t=wk,
                bias=(bx + bg + bk).reshape(-1, 1),        # (F_int, 1) f32
                wp_t=wp, bp=bp.reshape(1, 1))              # (1, F_int), (1, 1)


def _raw_branch(key, c_in, c_out):
    k1, k2, k3, k4, k5, k6 = jax.random.split(key, 6)
    return dict(
        w=jax.random.normal(k1, (c_in, c_out), jnp.float32) * 0.1,
        b=jax.random.normal(k2, (c_out,), jnp.float32) * 0.1,
        gamma=1.0 + 0.1 * jax.random.normal(k3, (c_out,), jnp.float32),
        beta=0.1 * jax.random.normal(k4, (c_out,), jnp.float32),
        mean=0.1 * jax.random.normal(k5, (c_out,), jnp.float32),
        var=jnp.abs(jax.random.normal(k6, (c_out,), jnp.float32)) + 0.5,
    )


def make_raw_params(key, F_g, F_l, F_K, F_int):
    kg, kx, kj, kp = jax.random.split(key, 4)
    return dict(Wg=_raw_branch(kg, F_g, F_int),
                Wx=_raw_branch(kx, F_l, F_int),
                Wj=_raw_branch(kj, F_K, F_int),
                psi=_raw_branch(kp, F_int, 1))


# ----------------------------------------------------------------------------
# Full forward (NCHW interface, matching the PyTorch module)
# ----------------------------------------------------------------------------
def global_attention_l2_forward(g, x, k, raw_params):
    """g: (B, F_g, H, W), x: (B, F_l, H, W), k: (B, F_K, H//2, W//2) (NCHW)."""
    B, F_g, H, W = g.shape
    F_l = x.shape[1]
    F_K = k.shape[1]
    assert k.shape[2] * 2 == H and k.shape[3] * 2 == W

    folded = fold_params(raw_params)
    F_int = folded["wx_t"].shape[0]

    # Horizontal (W) half of the 2x NN upsample on the small quarter-res k;
    # the vertical half happens inside the kernel, so the full-size k_up is
    # never materialized in HBM.
    # TODO(synk): move this lane interleave into the kernel as well.
    k_w = jnp.repeat(k, 2, axis=3)                         # (B, F_K, H//2, W)

    # Free reshapes of NCHW -> (B, C, tokens): per-batch slabs are already
    # channel-major with tokens on the lane axis.  No transpose, no concat,
    # no padding, and the kernel output is already in NCHW order.
    x3 = x.reshape(B, F_l, H * W)
    g3 = g.reshape(B, F_g, H * W)
    k3 = k_w.reshape(B, F_K, (H // 2) * W)

    vmem = _vmem_capacity_bytes()
    rh = _pick_row_tile(H, W, _target_tokens(F_l, F_g, F_K, F_int, vmem))
    tn = rh * W                                            # full-res tokens/tile
    grid = (B, H // rh)

    kernel = functools.partial(_ga_kernel, n_row_pairs=rh // 2, w=W)

    out = pl.pallas_call(
        kernel,
        out_shape=jax.ShapeDtypeStruct((B, F_l, H * W), jnp.float32),
        grid=grid,
        in_specs=[
            pl.BlockSpec((None, F_l, tn), lambda b, t: (b, 0, t)),       # x
            pl.BlockSpec((None, F_g, tn), lambda b, t: (b, 0, t)),       # g
            pl.BlockSpec((None, F_K, tn // 2), lambda b, t: (b, 0, t)),  # k (half-H)
            pl.BlockSpec((F_int, F_l), lambda b, t: (0, 0)),             # W_x^T
            pl.BlockSpec((F_int, F_g), lambda b, t: (0, 0)),             # W_g^T
            pl.BlockSpec((F_int, F_K), lambda b, t: (0, 0)),             # W_j^T
            pl.BlockSpec((F_int, 1), lambda b, t: (0, 0)),               # fused bias
            pl.BlockSpec((1, F_int), lambda b, t: (0, 0)),               # psi W^T
            pl.BlockSpec((1, 1), lambda b, t: (0, 0)),                   # psi bias
        ],
        out_specs=pl.BlockSpec((None, F_l, tn), lambda b, t: (b, 0, t)),
        compiler_params=pltpu.CompilerParams(
            dimension_semantics=("parallel", "parallel"),
            vmem_limit_bytes=int(0.75 * vmem),
        ),
    )(x3, g3, k3, folded["wx_t"], folded["wg_t"], folded["wk_t"],
      folded["bias"], folded["wp_t"], folded["bp"])

    return out.reshape(B, F_l, H, W)


# Pure-JAX reference, literally the PyTorch module's eval-mode forward.
def _reference(g, x, k, raw, eps=1e-5):
    k_up = jnp.repeat(jnp.repeat(k, 2, axis=2), 2, axis=3)

    def conv_bn(t, p):
        y = jnp.einsum("bchw,cd->bdhw", t, p["w"]) + p["b"][None, :, None, None]
        s = p["gamma"] / jnp.sqrt(p["var"] + eps)
        return ((y - p["mean"][None, :, None, None]) * s[None, :, None, None]
                + p["beta"][None, :, None, None])

    g1 = conv_bn(g, raw["Wg"])
    x1 = conv_bn(x, raw["Wx"])
    m1 = conv_bn(k_up, raw["Wj"])
    a = jnp.maximum(g1 + x1 + m1, 0.0)
    psi = jax.nn.sigmoid(conv_bn(a, raw["psi"]))
    return x * psi


if __name__ == "__main__":
    # Small, forward-consistent shapes: g/x at full res, k at half res.
    B, F_g, F_l, F_K, F_int = 2, 4, 4, 4, 32
    H = W = 16

    key = jax.random.PRNGKey(0)
    kp, kg, kx, kk = jax.random.split(key, 4)
    raw = make_raw_params(kp, F_g, F_l, F_K, F_int)

    g = jax.random.normal(kg, (B, F_g, H, W), jnp.float32)
    x = jax.random.normal(kx, (B, F_l, H, W), jnp.float32)
    k = jax.random.normal(kk, (B, F_K, H // 2, W // 2), jnp.float32)

    out = jax.block_until_ready(global_attention_l2_forward(g, x, k, raw))
    ref = _reference(g, x, k, raw)

    assert out.shape == (B, F_l, H, W)
    # bf16 folded weights / bf16 MXU operands (f32 accumulation, exact sigmoid,
    # f32 gate) -> small quantization error only.
    max_err = float(jnp.max(jnp.abs(out - ref)))
    assert max_err < 2e-2, max_err

    print("KERNEL_OK")
</pallas_src>

<mosaic_0001>
module attributes {stable_mosaic.version = 11 : i64} {
  func.func @_ga_kernel(%arg0: i32, %arg1: i32, %arg2: memref<1x4x256xf32, #tpu.memory_space<vmem>>, %arg3: memref<1x4x256xf32, #tpu.memory_space<vmem>>, %arg4: memref<1x4x128xf32, #tpu.memory_space<vmem>>, %arg5: memref<32x4xbf16, #tpu.memory_space<vmem>>, %arg6: memref<32x4xbf16, #tpu.memory_space<vmem>>, %arg7: memref<32x4xbf16, #tpu.memory_space<vmem>>, %arg8: memref<32x1xf32, #tpu.memory_space<vmem>>, %arg9: memref<1x32xbf16, #tpu.memory_space<vmem>>, %arg10: memref<1x1xf32, #tpu.memory_space<vmem>>, %arg11: memref<1x4x256xf32, #tpu.memory_space<vmem>>) attributes {dimension_semantics = [#tpu.dimension_semantics<parallel>, #tpu.dimension_semantics<parallel>], iteration_bounds = array<i64: 2, 1>, scalar_prefetch = 0 : i64, scratch_operands = 0 : i64, tpu.core_type = #tpu.core_type<tc>, window_params = [{transform_indices = @transform_0, window_bounds = array<i64: 1, 4, 256>}, {transform_indices = @transform_1, window_bounds = array<i64: 1, 4, 256>}, {transform_indices = @transform_2, window_bounds = array<i64: 1, 4, 128>}, {pipeline_mode = #tpu.pipeline_mode<synchronous>, transform_indices = @transform_3, window_bounds = array<i64: 32, 4>}, {pipeline_mode = #tpu.pipeline_mode<synchronous>, transform_indices = @transform_4, window_bounds = array<i64: 32, 4>}, {pipeline_mode = #tpu.pipeline_mode<synchronous>, transform_indices = @transform_5, window_bounds = array<i64: 32, 4>}, {pipeline_mode = #tpu.pipeline_mode<synchronous>, transform_indices = @transform_6, window_bounds = array<i64: 32, 1>}, {pipeline_mode = #tpu.pipeline_mode<synchronous>, transform_indices = @transform_7, window_bounds = array<i64: 1, 32>}, {pipeline_mode = #tpu.pipeline_mode<synchronous>, transform_indices = @transform_8, window_bounds = array<i64: 1, 1>}, {transform_indices = @transform_9, window_bounds = array<i64: 1, 4, 256>}]} {
    %c0 = arith.constant 0 : index
    %c0_0 = arith.constant 0 : index
    %c0_1 = arith.constant 0 : index
    %0 = vector.load %arg2[%c0, %c0_0, %c0_1] : memref<1x4x256xf32, #tpu.memory_space<vmem>>, vector<1x4x256xf32>
    %1 = vector.shape_cast %0 : vector<1x4x256xf32> to vector<4x256xf32>
    %c0_2 = arith.constant 0 : index
    %c0_3 = arith.constant 0 : index
    %2 = vector.load %arg5[%c0_2, %c0_3] : memref<32x4xbf16, #tpu.memory_space<vmem>>, vector<32x4xbf16>
    %3 = arith.truncf %1 : vector<4x256xf32> to vector<4x256xbf16>
    %cst = arith.constant dense<0.000000e+00> : vector<32x256xf32>
    %4 = tpu.matmul %2, %3, %cst {dimension_numbers = #tpu.dot_dimension_numbers<[1], [0], [0], [1], [0, 0, 1, 1], [], []>} : vector<32x4xbf16>, vector<4x256xbf16>, vector<32x256xf32> -> vector<32x256xf32>
    %c0_4 = arith.constant 0 : index
    %c0_5 = arith.constant 0 : index
    %5 = vector.load %arg6[%c0_4, %c0_5] : memref<32x4xbf16, #tpu.memory_space<vmem>>, vector<32x4xbf16>
    %c0_6 = arith.constant 0 : index
    %c0_7 = arith.constant 0 : index
    %c0_8 = arith.constant 0 : index
    %6 = vector.load %arg3[%c0_6, %c0_7, %c0_8] : memref<1x4x256xf32, #tpu.memory_space<vmem>>, vector<1x4x256xf32>
    %7 = vector.shape_cast %6 : vector<1x4x256xf32> to vector<4x256xf32>
    %8 = arith.truncf %7 : vector<4x256xf32> to vector<4x256xbf16>
    %cst_9 = arith.constant dense<0.000000e+00> : vector<32x256xf32>
    %9 = tpu.matmul %5, %8, %cst_9 {dimension_numbers = #tpu.dot_dimension_numbers<[1], [0], [0], [1], [0, 0, 1, 1], [], []>} : vector<32x4xbf16>, vector<4x256xbf16>, vector<32x256xf32> -> vector<32x256xf32>
    %10 = arith.addf %4, %9 : vector<32x256xf32>
    %c0_10 = arith.constant 0 : index
    %c0_11 = arith.constant 0 : index
    %11 = vector.load %arg7[%c0_10, %c0_11] : memref<32x4xbf16, #tpu.memory_space<vmem>>, vector<32x4xbf16>
    %c0_12 = arith.constant 0 : index
    %c0_13 = arith.constant 0 : index
    %c0_14 = arith.constant 0 : index
    %12 = vector.load %arg4[%c0_12, %c0_13, %c0_14] : memref<1x4x128xf32, #tpu.memory_space<vmem>>, vector<1x4x128xf32>
    %13 = vector.shape_cast %12 : vector<1x4x128xf32> to vector<4x128xf32>
    %14 = arith.truncf %13 : vector<4x128xf32> to vector<4x128xbf16>
    %cst_15 = arith.constant dense<0.000000e+00> : vector<32x128xf32>
    %15 = tpu.matmul %11, %14, %cst_15 {dimension_numbers = #tpu.dot_dimension_numbers<[1], [0], [0], [1], [0, 0, 1, 1], [], []>} : vector<32x4xbf16>, vector<4x128xbf16>, vector<32x128xf32> -> vector<32x128xf32>
    %16 = vector.extract_strided_slice %15 {offsets = [0, 0], sizes = [32, 16], strides = [1, 1]} : vector<32x128xf32> to vector<32x16xf32>
    %17 = vector.extract_strided_slice %15 {offsets = [0, 16], sizes = [32, 16], strides = [1, 1]} : vector<32x128xf32> to vector<32x16xf32>
    %18 = vector.extract_strided_slice %15 {offsets = [0, 32], sizes = [32, 16], strides = [1, 1]} : vector<32x128xf32> to vector<32x16xf32>
    %19 = vector.extract_strided_slice %15 {offsets = [0, 48], sizes = [32, 16], strides = [1, 1]} : vector<32x128xf32> to vector<32x16xf32>
    %20 = vector.extract_strided_slice %15 {offsets = [0, 64], sizes = [32, 16], strides = [1, 1]} : vector<32x128xf32> to vector<32x16xf32>
    %21 = vector.extract_strided_slice %15 {offsets = [0, 80], sizes = [32, 16], strides = [1, 1]} : vector<32x128xf32> to vector<32x16xf32>
    %22 = vector.extract_strided_slice %15 {offsets = [0, 96], sizes = [32, 16], strides = [1, 1]} : vector<32x128xf32> to vector<32x16xf32>
    %23 = vector.extract_strided_slice %15 {offsets = [0, 112], sizes = [32, 16], strides = [1, 1]} : vector<32x128xf32> to vector<32x16xf32>
    %24 = tpu.concatenate %16, %16, %17, %17, %18, %18, %19, %19, %20, %20, %21, %21, %22, %22, %23, %23 in 1 : vector<32x16xf32>, vector<32x16xf32>, vector<32x16xf32>, vector<32x16xf32>, vector<32x16xf32>, vector<32x16xf32>, vector<32x16xf32>, vector<32x16xf32>, vector<32x16xf32>, vector<32x16xf32>, vector<32x16xf32>, vector<32x16xf32>, vector<32x16xf32>, vector<32x16xf32>, vector<32x16xf32>, vector<32x16xf32> -> vector<32x256xf32>
    %25 = arith.addf %10, %24 : vector<32x256xf32>
    %c0_16 = arith.constant 0 : index
    %c0_17 = arith.constant 0 : index
    %26 = vector.load %arg8[%c0_16, %c0_17] : memref<32x1xf32, #tpu.memory_space<vmem>>, vector<32x1xf32>
    %27 = vector.broadcast %26 : vector<32x1xf32> to vector<32x256xf32>
    %28 = arith.addf %25, %27 : vector<32x256xf32>
    %cst_18 = arith.constant 0.000000e+00 : f32
    %29 = vector.broadcast %cst_18 : f32 to vector<32x256xf32>
    %30 = arith.maximumf %28, %29 : vector<32x256xf32>
    %c0_19 = arith.constant 0 : index
    %c0_20 = arith.constant 0 : index
    %31 = vector.load %arg9[%c0_19, %c0_20] : memref<1x32xbf16, #tpu.memory_space<vmem>>, vector<1x32xbf16>
    %32 = arith.truncf %30 : vector<32x256xf32> to vector<32x256xbf16>
    %cst_21 = arith.constant dense<0.000000e+00> : vector<1x256xf32>
    %33 = tpu.matmul %31, %32, %cst_21 {dimension_numbers = #tpu.dot_dimension_numbers<[1], [0], [0], [1], [0, 0, 1, 1], [], []>} : vector<1x32xbf16>, vector<32x256xbf16>, vector<1x256xf32> -> vector<1x256xf32>
    %c0_22 = arith.constant 0 : index
    %c0_23 = arith.constant 0 : index
    %34 = vector.load %arg10[%c0_22, %c0_23] : memref<1x1xf32, #tpu.memory_space<vmem>>, vector<1x1xf32>
    %35 = vector.broadcast %34 : vector<1x1xf32> to vector<1x256xf32>
    %36 = arith.addf %33, %35 : vector<1x256xf32>
    %cst_24 = arith.constant 0.000000e+00 : f32
    %37 = vector.broadcast %cst_24 : f32 to vector<1x256xf32>
    %38 = arith.subf %37, %36 : vector<1x256xf32>
    %39 = math.exp %38 : vector<1x256xf32>
    %cst_25 = arith.constant 1.000000e+00 : f32
    %40 = vector.broadcast %cst_25 : f32 to vector<1x256xf32>
    %41 = arith.addf %40, %39 : vector<1x256xf32>
    %cst_26 = arith.constant 1.000000e+00 : f32
    %42 = vector.broadcast %cst_26 : f32 to vector<1x256xf32>
    %43 = arith.divf %42, %41 : vector<1x256xf32>
    %44 = vector.broadcast %43 : vector<1x256xf32> to vector<4x256xf32>
    %45 = arith.mulf %1, %44 : vector<4x256xf32>
    %c0_27 = arith.constant 0 : index
    %c0_28 = arith.constant 0 : index
    %c0_29 = arith.constant 0 : index
    %46 = vector.load %arg11[%c0_27, %c0_28, %c0_29] : memref<1x4x256xf32, #tpu.memory_space<vmem>>, vector<1x4x256xf32>
    %47 = vector.shape_cast %46 : vector<1x4x256xf32> to vector<4x256xf32>
    %48 = vector.shape_cast %45 : vector<4x256xf32> to vector<1x4x256xf32>
    tpu.vector_store %arg11[%c0_27, %c0_28, %c0_29], %48 {strides = array<i32>} : memref<1x4x256xf32, #tpu.memory_space<vmem>>, vector<1x4x256xf32>,
    return
  }
  func.func @transform_0(%arg0: i32, %arg1: i32) -> (i32, i32, i32) {
    %c0_i32 = arith.constant 0 : i32
    %c0_i32_0 = arith.constant 0 : i32
    return %arg0, %c0_i32, %arg1 : i32, i32, i32
  }
  func.func @transform_1(%arg0: i32, %arg1: i32) -> (i32, i32, i32) {
    %c0_i32 = arith.constant 0 : i32
    %c0_i32_0 = arith.constant 0 : i32
    return %arg0, %c0_i32, %arg1 : i32, i32, i32
  }
  func.func @transform_2(%arg0: i32, %arg1: i32) -> (i32, i32, i32) {
    %c0_i32 = arith.constant 0 : i32
    %c0_i32_0 = arith.constant 0 : i32
    return %arg0, %c0_i32, %arg1 : i32, i32, i32
  }
  func.func @transform_3(%arg0: i32, %arg1: i32) -> (i32, i32) {
    %c0_i32 = arith.constant 0 : i32
    %c0_i32_0 = arith.constant 0 : i32
    %c0_i32_1 = arith.constant 0 : i32
    return %c0_i32, %c0_i32_0 : i32, i32
  }
  func.func @transform_4(%arg0: i32, %arg1: i32) -> (i32, i32) {
    %c0_i32 = arith.constant 0 : i32
    %c0_i32_0 = arith.constant 0 : i32
    %c0_i32_1 = arith.constant 0 : i32
    return %c0_i32, %c0_i32_0 : i32, i32
  }
  func.func @transform_5(%arg0: i32, %arg1: i32) -> (i32, i32) {
    %c0_i32 = arith.constant 0 : i32
    %c0_i32_0 = arith.constant 0 : i32
    %c0_i32_1 = arith.constant 0 : i32
    return %c0_i32, %c0_i32_0 : i32, i32
  }
  func.func @transform_6(%arg0: i32, %arg1: i32) -> (i32, i32) {
    %c0_i32 = arith.constant 0 : i32
    %c0_i32_0 = arith.constant 0 : i32
    %c0_i32_1 = arith.constant 0 : i32
    return %c0_i32, %c0_i32_0 : i32, i32
  }
  func.func @transform_7(%arg0: i32, %arg1: i32) -> (i32, i32) {
    %c0_i32 = arith.constant 0 : i32
    %c0_i32_0 = arith.constant 0 : i32
    %c0_i32_1 = arith.constant 0 : i32
    return %c0_i32, %c0_i32_0 : i32, i32
  }
  func.func @transform_8(%arg0: i32, %arg1: i32) -> (i32, i32) {
    %c0_i32 = arith.constant 0 : i32
    %c0_i32_0 = arith.constant 0 : i32
    %c0_i32_1 = arith.constant 0 : i32
    return %c0_i32, %c0_i32_0 : i32, i32
  }
  func.func @transform_9(%arg0: i32, %arg1: i32) -> (i32, i32, i32) {
    %c0_i32 = arith.constant 0 : i32
    %c0_i32_0 = arith.constant 0 : i32
    return %arg0, %c0_i32, %arg1 : i32, i32, i32
  }
}

</mosaic_0001>

<llo_original>
// kernel: tpu_custom_call.1
$region0: #{tpu_custom_call.1}
  #allocation0 [shape = 'u32[]', space=smem, size = 0x4, offset = 0x4, fixed_abs, tag = 'smem constant byte address 0x4 - core index']
  #allocation1 [shape = 'u32[144,128]{1,0:T(1,128)}', space=vmem, size = 0x12000, scoped, tag = 'internal scratch']
  #allocation2 [shape = 'f32[1,1]{1,0:T(1,128)S(1)}', space=vmem, size = 0x200, scoped, tag = 'scoped memory for tpu_custom_call.1']
  %s0 = inlined_call_operand.vmem [shape: f32[2,4,256], index: 0, kind: input, shape index: {}]
  %s1 = inlined_call_operand.vmem [shape: f32[2,4,256], index: 1, kind: input, shape index: {}]
  %s2 = inlined_call_operand.vmem [shape: f32[2,4,128], index: 2, kind: input, shape index: {}]
  %s3 = inlined_call_operand.vmem [shape: bf16[32,4], index: 3, kind: input, shape index: {}]
  %s4 = inlined_call_operand.vmem [shape: bf16[32,4], index: 4, kind: input, shape index: {}]
  %s5 = inlined_call_operand.vmem [shape: bf16[32,4], index: 5, kind: input, shape index: {}]
  %s6 = inlined_call_operand.vmem [shape: f32[32,1], index: 6, kind: input, shape index: {}]
  %s7 = inlined_call_operand.vmem [shape: bf16[1,32], index: 7, kind: input, shape index: {}]
  %s8 = inlined_call_operand.<no memory space> [shape: f32[1,1], index: 8, kind: input, shape index: {}]
  %s9 = inlined_call_operand.hbm [shape: f32[2,4,256], index: 9, kind: output, shape index: {}]
  %s10 = sld [smem:[#allocation0]]
  $region69: #{tpu_custom_call.1} parent=0
    _
  %s12 = ssub.s32 1, %s10
  %s13 = scalar_select 0, %s12, %s10
  %v14 = vstv %s8
  %15 = vst [vmem:[#allocation2] sm:$0x1] %v14
  $region1: #{tpu_custom_call.1} parent=0
    #allocation3 [shape = 'u8[8192]{0}', space=vmem, size = 0x2000, scoped, tag = 'output window, operand 0']
    #allocation4 [shape = 's32[2]{0}', space=sflag, size = 0x8, scoped, tag = 'scoped memory for tpu_custom_call.1']
    %16 = vsyncpa [#allocation4], 0
    %s17 = scalar_lea.sflag [#allocation4], 1
    %18 = vsyncpa %s17, 0
    loop: start=0, step=1, limit=4
    $region2: #{tpu_custom_call.1} parent=1 // loop_pre_header
      _
    $region3: #{tpu_custom_call.1} parent=1 // loop_header
      %s20 = sphi 0, %s24
      %p21 = scmp.ge.s32.totalorder %s20, 4
      %s27 = sphi 0, %s39
      %s28 = sphi 0, %s35
      %s29 = sphi 0, %s27
      %s30 = sphi 0, %s28
      %s31 = sphi 0, %s29
      %s32 = sphi 0, %s30
      %s44 = sphi 0, %s46
      %s47 = sphi 0, %s44
      %s48 = sphi 0, %s47
      %s64 = sphi 0, %s48
      %s72 = sphi 0, %s74
      %s75 = sphi 0, %s72
      %s76 = sphi 0, %s75
      %s92 = sphi 0, %s76
      %s100 = sphi 0, %s102
      %s103 = sphi 0, %s100
      %s104 = sphi 0, %s103
      %s120 = sphi 0, %s104
      %s124 = sphi 0, %s124
      %s126 = sphi 0, %s124
      %s127 = sphi 0, %s126
      %s141 = sphi 0, %s127
      %s145 = sphi 0, %s145
      %s147 = sphi 0, %s145
      %s148 = sphi 0, %s147
      %s162 = sphi 0, %s148
      %s166 = sphi 0, %s166
      %s168 = sphi 0, %s166
      %s169 = sphi 0, %s168
      %s183 = sphi 0, %s169
      %s187 = sphi 0, %s187
      %s189 = sphi 0, %s187
      %s190 = sphi 0, %s189
      %s204 = sphi 0, %s190
      %s208 = sphi 0, %s208
      %s210 = sphi 0, %s208
      %s211 = sphi 0, %s210
      %s225 = sphi 0, %s211
      %s229 = sphi 0, %s229
      %s231 = sphi 0, %s229
      %s232 = sphi 0, %s231
      %s246 = sphi 0, %s232
      %s254 = sphi 0, %s256
      %s257 = sphi 0, %s254
      %s258 = sphi 0, %s257
      %s274 = sphi 0, %s258
    $region4: #{tpu_custom_call.1} parent=1 // loop_header_branch
      %23 = sbr.rel (%p21) target = $region8
    $region5: #{tpu_custom_call.1} parent=1 // loop_body
      %s25 = ssub.s32 %s20, 1
      %s26 = ssub.s32 %s20, 2
      %s33 = sadd.s32 1, %s28
      %p34 = scmp.ge.s32.totalorder %s33, 1
      %s35 = scalar_select %p34, 0, %s33
      %s36 = sadd.s32 1, %s27
      %s37 = scalar_select %p34, %s36, %s27
      %p38 = scmp.ge.s32.totalorder %s37, 2
      %s39 = scalar_select %p38, 0, %s37
      %s40 = ssub.s32 %s27, %s39
      %s41 = ssub.s32 %s28, %s35
      %s42 = sor.u32 %s40, %s41
      %p43 = scmp.eq.s32.totalorder %s42, 0
      %s45 = sadd.s32 %s44, 1
      %s46 = scalar_select %p43, %s44, %s45
      %p49 = pneg %p43
      %p50 = scmp.eq.s32.totalorder %s20, 1
      %p51 = por %p49, %p50
      %p52 = scmp.ne.s32.totalorder %s44, %s47
      %p53 = scmp.eq.s32.totalorder %s20, 0
      %p54 = por %p52, %p53
      %p55 = scmp.ne.s32.totalorder %s44, %s47
      %p56 = scmp.eq.s32.totalorder %s25, 1
      %p57 = por %p55, %p56
      %p58 = scmp.ne.s32.totalorder %s47, %s48
      %p59 = scmp.eq.s32.totalorder %s25, 0
      %p60 = por %p58, %p59
      %p61 = scmp.ne.s32.totalorder %s47, %s48
      %p62 = scmp.eq.s32.totalorder %s26, 1
      %p63 = por %p61, %p62
      %p65 = scmp.ne.s32.totalorder %s48, %s64
      %p66 = scmp.eq.s32.totalorder %s26, 0
      %p67 = por %p65, %p66
      %s68 = ssub.s32 %s27, %s39
      %s69 = ssub.s32 %s28, %s35
      %s70 = sor.u32 %s68, %s69
      %p71 = scmp.eq.s32.totalorder %s70, 0
      %s73 = sadd.s32 %s72, 1
      %s74 = scalar_select %p71, %s72, %s73
      %p77 = pneg %p71
      %p78 = scmp.eq.s32.totalorder %s20, 1
      %p79 = por %p77, %p78
      %p80 = scmp.ne.s32.totalorder %s72, %s75
      %p81 = scmp.eq.s32.totalorder %s20, 0
      %p82 = por %p80, %p81
      %p83 = scmp.ne.s32.totalorder %s72, %s75
      %p84 = scmp.eq.s32.totalorder %s25, 1
      %p85 = por %p83, %p84
      %p86 = scmp.ne.s32.totalorder %s75, %s76
      %p87 = scmp.eq.s32.totalorder %s25, 0
      %p88 = por %p86, %p87
      %p89 = scmp.ne.s32.totalorder %s75, %s76
      %p90 = scmp.eq.s32.totalorder %s26, 1
      %p91 = por %p89, %p90
      %p93 = scmp.ne.s32.totalorder %s76, %s92
      %p94 = scmp.eq.s32.totalorder %s26, 0
      %p95 = por %p93, %p94
      %s96 = ssub.s32 %s27, %s39
      %s97 = ssub.s32 %s28, %s35
      %s98 = sor.u32 %s96, %s97
      %p99 = scmp.eq.s32.totalorder %s98, 0
      %s101 = sadd.s32 %s100, 1
      %s102 = scalar_select %p99, %s100, %s101
      %p105 = pneg %p99
      %p106 = scmp.eq.s32.totalorder %s20, 1
      %p107 = por %p105, %p106
      %p108 = scmp.ne.s32.totalorder %s100, %s103
      %p109 = scmp.eq.s32.totalorder %s20, 0
      %p110 = por %p108, %p109
      %p111 = scmp.ne.s32.totalorder %s100, %s103
      %p112 = scmp.eq.s32.totalorder %s25, 1
      %p113 = por %p111, %p112
      %p114 = scmp.ne.s32.totalorder %s103, %s104
      %p115 = scmp.eq.s32.totalorder %s25, 0
      %p116 = por %p114, %p115
      %p117 = scmp.ne.s32.totalorder %s103, %s104
      %p118 = scmp.eq.s32.totalorder %s26, 1
      %p119 = por %p117, %p118
      %p121 = scmp.ne.s32.totalorder %s104, %s120
      %p122 = scmp.eq.s32.totalorder %s26, 0
      %p123 = por %p121, %p122
      %s125 = sadd.s32 %s124, 1
      %p128 = scmp.eq.s32.totalorder %s20, 1
      %p129 = scmp.ne.s32.totalorder %s124, %s126
      %p130 = scmp.eq.s32.totalorder %s20, 0
      %p131 = por %p129, %p130
      %p132 = scmp.ne.s32.totalorder %s124, %s126
      %p133 = scmp.eq.s32.totalorder %s25, 1
      %p134 = por %p132, %p133
      %p135 = scmp.ne.s32.totalorder %s126, %s127
      %p136 = scmp.eq.s32.totalorder %s25, 0
      %p137 = por %p135, %p136
      %p138 = scmp.ne.s32.totalorder %s126, %s127
      %p139 = scmp.eq.s32.totalorder %s26, 1
      %p140 = por %p138, %p139
      %p142 = scmp.ne.s32.totalorder %s127, %s141
      %p143 = scmp.eq.s32.totalorder %s26, 0
      %p144 = por %p142, %p143
      %s146 = sadd.s32 %s145, 1
      %p149 = scmp.eq.s32.totalorder %s20, 1
      %p150 = scmp.ne.s32.totalorder %s145, %s147
      %p151 = scmp.eq.s32.totalorder %s20, 0
      %p152 = por %p150, %p151
      %p153 = scmp.ne.s32.totalorder %s145, %s147
      %p154 = scmp.eq.s32.totalorder %s25, 1
      %p155 = por %p153, %p154
      %p156 = scmp.ne.s32.totalorder %s147, %s148
      %p157 = scmp.eq.s32.totalorder %s25, 0
      %p158 = por %p156, %p157
      %p159 = scmp.ne.s32.totalorder %s147, %s148
      %p160 = scmp.eq.s32.totalorder %s26, 1
      %p161 = por %p159, %p160
      %p163 = scmp.ne.s32.totalorder %s148, %s162
      %p164 = scmp.eq.s32.totalorder %s26, 0
      %p165 = por %p163, %p164
      %s167 = sadd.s32 %s166, 1
      %p170 = scmp.eq.s32.totalorder %s20, 1
      %p171 = scmp.ne.s32.totalorder %s166, %s168
      %p172 = scmp.eq.s32.totalorder %s20, 0
      %p173 = por %p171, %p172
      %p174 = scmp.ne.s32.totalorder %s166, %s168
      %p175 = scmp.eq.s32.totalorder %s25, 1
      %p176 = por %p174, %p175
      %p177 = scmp.ne.s32.totalorder %s168, %s169
      %p178 = scmp.eq.s32.totalorder %s25, 0
      %p179 = por %p177, %p178
      %p180 = scmp.ne.s32.totalorder %s168, %s169
      %p181 = scmp.eq.s32.totalorder %s26, 1
      %p182 = por %p180, %p181
      %p184 = scmp.ne.s32.totalorder %s169, %s183
      %p185 = scmp.eq.s32.totalorder %s26, 0
      %p186 = por %p184, %p185
      %s188 = sadd.s32 %s187, 1
      %p191 = scmp.eq.s32.totalorder %s20, 1
      %p192 = scmp.ne.s32.totalorder %s187, %s189
      %p193 = scmp.eq.s32.totalorder %s20, 0
      %p194 = por %p192, %p193
      %p195 = scmp.ne.s32.totalorder %s187, %s189
      %p196 = scmp.eq.s32.totalorder %s25, 1
      %p197 = por %p195, %p196
      %p198 = scmp.ne.s32.totalorder %s189, %s190
      %p199 = scmp.eq.s32.totalorder %s25, 0
      %p200 = por %p198, %p199
      %p201 = scmp.ne.s32.totalorder %s189, %s190
      %p202 = scmp.eq.s32.totalorder %s26, 1
      %p203 = por %p201, %p202
      %p205 = scmp.ne.s32.totalorder %s190, %s204
      %p206 = scmp.eq.s32.totalorder %s26, 0
      %p207 = por %p205, %p206
      %s209 = sadd.s32 %s208, 1
      %p212 = scmp.eq.s32.totalorder %s20, 1
      %p213 = scmp.ne.s32.totalorder %s208, %s210
      %p214 = scmp.eq.s32.totalorder %s20, 0
      %p215 = por %p213, %p214
      %p216 = scmp.ne.s32.totalorder %s208, %s210
      %p217 = scmp.eq.s32.totalorder %s25, 1
      %p218 = por %p216, %p217
      %p219 = scmp.ne.s32.totalorder %s210, %s211
      %p220 = scmp.eq.s32.totalorder %s25, 0
      %p221 = por %p219, %p220
      %p222 = scmp.ne.s32.totalorder %s210, %s211
      %p223 = scmp.eq.s32.totalorder %s26, 1
      %p224 = por %p222, %p223
      %p226 = scmp.ne.s32.totalorder %s211, %s225
      %p227 = scmp.eq.s32.totalorder %s26, 0
      %p228 = por %p226, %p227
      %s230 = sadd.s32 %s229, 1
      %p233 = scmp.eq.s32.totalorder %s20, 1
      %p234 = scmp.ne.s32.totalorder %s229, %s231
      %p235 = scmp.eq.s32.totalorder %s20, 0
      %p236 = por %p234, %p235
      %p237 = scmp.ne.s32.totalorder %s229, %s231
      %p238 = scmp.eq.s32.totalorder %s25, 1
      %p239 = por %p237, %p238
      %p240 = scmp.ne.s32.totalorder %s231, %s232
      %p241 = scmp.eq.s32.totalorder %s25, 0
      %p242 = por %p240, %p241
      %p243 = scmp.ne.s32.totalorder %s231, %s232
      %p244 = scmp.eq.s32.totalorder %s26, 1
      %p245 = por %p243, %p244
      %p247 = scmp.ne.s32.totalorder %s232, %s246
      %p248 = scmp.eq.s32.totalorder %s26, 0
      %p249 = por %p247, %p248
      %s250 = ssub.s32 %s27, %s39
      %s251 = ssub.s32 %s28, %s35
      %s252 = sor.u32 %s250, %s251
      %p253 = scmp.eq.s32.totalorder %s252, 0
      %s255 = sadd.s32 %s254, 1
      %s256 = scalar_select %p253, %s254, %s255
      %p259 = pneg %p253
      %p260 = scmp.eq.s32.totalorder %s20, 1
      %p261 = por %p259, %p260
      %p262 = scmp.ne.s32.totalorder %s254, %s257
      %p263 = scmp.eq.s32.totalorder %s20, 0
      %p264 = por %p262, %p263
      %p265 = scmp.ne.s32.totalorder %s254, %s257
      %p266 = scmp.eq.s32.totalorder %s25, 1
      %p267 = por %p265, %p266
      %p268 = scmp.ne.s32.totalorder %s257, %s258
      %p269 = scmp.eq.s32.totalorder %s25, 0
      %p270 = por %p268, %p269
      %p271 = scmp.ne.s32.totalorder %s257, %s258
      %p272 = scmp.eq.s32.totalorder %s26, 1
      %p273 = por %p271, %p272
      %p275 = scmp.ne.s32.totalorder %s258, %s274
      %p276 = scmp.eq.s32.totalorder %s26, 0
      %p277 = por %p275, %p276
      %p278 = scmp.le.s32.totalorder 1, %s20
      %p279 = scmp.lt.s32.totalorder %s20, 3
      %p280 = pnand %p278, %p279
      %p281 = pneg %p280
      // Predicated region
      $region9: #{tpu_custom_call.1} parent=5 // pred_check
        _
      $region10: #{tpu_custom_call.1} parent=5 // pred_check_branch
        %283 = sbr.rel (%p280) target = $region12
      $region11: #{tpu_custom_call.1} parent=5 // pred_region
        %s284 = ssub.s32 %s20, 1
        // Predicated region
        $region13: #{tpu_custom_call.1} parent=11 // pred_check
          %p285 = pneg %p137
        $region14: #{tpu_custom_call.1} parent=11 // pred_check_branch
          %287 = sbr.rel (%p285) target = $region16
        $region15: #{tpu_custom_call.1} parent=11 // pred_region
          _
        $region16: #{tpu_custom_call.1} parent=11 // pred_fallthru
          _
        // Predicated region
        $region17: #{tpu_custom_call.1} parent=11 // pred_check
          %p288 = pneg %p158
        $region18: #{tpu_custom_call.1} parent=11 // pred_check_branch
          %290 = sbr.rel (%p288) target = $region20
        $region19: #{tpu_custom_call.1} parent=11 // pred_region
          _
        $region20: #{tpu_custom_call.1} parent=11 // pred_fallthru
          _
        // Predicated region
        $region21: #{tpu_custom_call.1} parent=11 // pred_check
          %p291 = pneg %p179
        $region22: #{tpu_custom_call.1} parent=11 // pred_check_branch
          %293 = sbr.rel (%p291) target = $region24
        $region23: #{tpu_custom_call.1} parent=11 // pred_region
          _
        $region24: #{tpu_custom_call.1} parent=11 // pred_fallthru
          _
        // Predicated region
        $region25: #{tpu_custom_call.1} parent=11 // pred_check
          %p294 = pneg %p200
        $region26: #{tpu_custom_call.1} parent=11 // pred_check_branch
          %296 = sbr.rel (%p294) target = $region28
        $region27: #{tpu_custom_call.1} parent=11 // pred_region
          _
        $region28: #{tpu_custom_call.1} parent=11 // pred_fallthru
          _
        // Predicated region
        $region29: #{tpu_custom_call.1} parent=11 // pred_check
          %p297 = pneg %p221
        $region30: #{tpu_custom_call.1} parent=11 // pred_check_branch
          %299 = sbr.rel (%p297) target = $region32
        $region31: #{tpu_custom_call.1} parent=11 // pred_region
          _
        $region32: #{tpu_custom_call.1} parent=11 // pred_fallthru
          _
        // Predicated region
        $region33: #{tpu_custom_call.1} parent=11 // pred_check
          %p300 = pneg %p242
        $region34: #{tpu_custom_call.1} parent=11 // pred_check_branch
          %302 = sbr.rel (%p300) target = $region36
        $region35: #{tpu_custom_call.1} parent=11 // pred_region
          _
        $region36: #{tpu_custom_call.1} parent=11 // pred_fallthru
          _
      $region12: #{tpu_custom_call.1} parent=5 // pred_fallthru
        _
      %p303 = scmp.lt.s32.totalorder %s20, 2
      // Predicated region
      $region37: #{tpu_custom_call.1} parent=5 // pred_check
        %p304 = pneg %p303
      $region38: #{tpu_custom_call.1} parent=5 // pred_check_branch
        %306 = sbr.rel (%p304) target = $region40
      $region39: #{tpu_custom_call.1} parent=5 // pred_region
        // Predicated region
        $region41: #{tpu_custom_call.1} parent=39 // pred_check
          %p307 = pneg %p54
        $region42: #{tpu_custom_call.1} parent=39 // pred_check_branch
          %309 = sbr.rel (%p307) target = $region44
        $region43: #{tpu_custom_call.1} parent=39 // pred_region
          %s310 = smul.u32 2, %s28
          %p311 = scmp.lt.s32.totalorder %s27, 1
          %s312 = scalar_select %p311, %s27, 1
          %p313 = scmp.lt.s32.totalorder %s310, 1
          %s314 = scalar_select %p313, %s310, 1
          %s315 = smul.addr %s312, 2
          %s316 = sadd.s32 %s314, %s315
          %s317 = smul.addr %s316, 4
          %s318 = scalar_lea.vmem %s0, %s317
          %s319 = smul.u32 2, %s28
        $region44: #{tpu_custom_call.1} parent=39 // pred_fallthru
          _
        // Predicated region
        $region45: #{tpu_custom_call.1} parent=39 // pred_check
          %p320 = pneg %p82
        $region46: #{tpu_custom_call.1} parent=39 // pred_check_branch
          %322 = sbr.rel (%p320) target = $region48
        $region47: #{tpu_custom_call.1} parent=39 // pred_region
          %s323 = smul.u32 2, %s28
          %p324 = scmp.lt.s32.totalorder %s27, 1
          %s325 = scalar_select %p324, %s27, 1
          %p326 = scmp.lt.s32.totalorder %s323, 1
          %s327 = scalar_select %p326, %s323, 1
          %s328 = smul.addr %s325, 2
          %s329 = sadd.s32 %s327, %s328
          %s330 = smul.addr %s329, 4
          %s331 = scalar_lea.vmem %s1, %s330
          %s332 = smul.u32 2, %s28
        $region48: #{tpu_custom_call.1} parent=39 // pred_fallthru
          _
        // Predicated region
        $region49: #{tpu_custom_call.1} parent=39 // pred_check
          %p333 = pneg %p110
        $region50: #{tpu_custom_call.1} parent=39 // pred_check_branch
          %335 = sbr.rel (%p333) target = $region52
        $region51: #{tpu_custom_call.1} parent=39 // pred_region
          %p336 = scmp.lt.s32.totalorder %s27, 1
          %s337 = scalar_select %p336, %s27, 1
          %p338 = scmp.lt.s32.totalorder %s28, 0
          %s339 = scalar_select %p338, %s28, 0
          %s340 = sadd.s32 %s339, %s337
          %s341 = smul.addr %s340, 4
          %s342 = scalar_lea.vmem %s2, %s341
        $region52: #{tpu_custom_call.1} parent=39 // pred_fallthru
          _
      $region40: #{tpu_custom_call.1} parent=5 // pred_fallthru
        _
      %p343 = scmp.le.s32.totalorder 1, %s20
      %p344 = scmp.lt.s32.totalorder %s20, 3
      %p345 = pnand %p343, %p344
      %p346 = pneg %p345
      // Predicated region
      $region53: #{tpu_custom_call.1} parent=5 // pred_check
        _
      $region54: #{tpu_custom_call.1} parent=5 // pred_check_branch
        %348 = sbr.rel (%p345) target = $region56
      $region55: #{tpu_custom_call.1} parent=5 // pred_region
        %s349 = ssub.s32 %s20, 1
        %s350 = smul.u32 2, %s30
        %p351 = scmp.lt.s32.totalorder %s29, 1
        %s352 = scalar_select %p351, %s29, 1
        %p353 = scmp.lt.s32.totalorder %s350, 1
        %s354 = scalar_select %p353, %s350, 1
        %s355 = smul.addr %s352, 2
        %s356 = sadd.s32 %s354, %s355
        %s357 = smul.addr %s356, 4
        %s358 = scalar_lea.vmem %s0, %s357
        %p359 = pneg %p60
        %p360 = pneg %p57
        %s361 = smul.u32 2, %s30
        %p362 = scmp.lt.s32.totalorder %s29, 1
        %s363 = scalar_select %p362, %s29, 1
        %p364 = scmp.lt.s32.totalorder %s361, 1
        %s365 = scalar_select %p364, %s361, 1
        %s366 = smul.addr %s363, 2
        %s367 = sadd.s32 %s365, %s366
        %s368 = smul.addr %s367, 4
        %s369 = scalar_lea.vmem %s1, %s368
        %p370 = pneg %p88
        %p371 = pneg %p85
        %p372 = scmp.lt.s32.totalorder %s29, 1
        %s373 = scalar_select %p372, %s29, 1
        %p374 = scmp.lt.s32.totalorder %s30, 0
        %s375 = scalar_select %p374, %s30, 0
        %s376 = sadd.s32 %s375, %s373
        %s377 = smul.addr %s376, 4
        %s378 = scalar_lea.vmem %s2, %s377
        %p379 = pneg %p116
        %p380 = pneg %p113
        %p381 = pneg %p137
        %p382 = pneg %p134
        %p383 = pneg %p158
        %p384 = pneg %p155
        %p385 = pneg %p179
        %p386 = pneg %p176
        %p387 = pneg %p200
        %p388 = pneg %p197
        %p389 = pneg %p221
        %p390 = pneg %p218
        %p391 = pneg %p242
        %p392 = pneg %p239
        %p393 = pneg %p270
        %p394 = pneg %p267
        %s395 = sand.u32 %s257, 1
        %s396 = scalar_lea.sflag [#allocation4], %s395
        %s397 = sand.u32 %s257, 1
        %s398 = smul.addr %s397, 8
        %s399 = scalar_lea.vmem [#allocation3], %s398
        %s400 = smul.u32 2, %s30
        %p401 = scmp.lt.s32.totalorder %s29, 1
        %s402 = scalar_select %p401, %s29, 1
        %p403 = scmp.lt.s32.totalorder %s400, 1
        %s404 = scalar_select %p403, %s400, 1
        %s405 = smul.addr %s402, 2
        %s406 = sadd.s32 %s404, %s405
        %s407 = smul.addr %s406, 4
        %s408 = scalar_lea.vmem %s0, %s407
        %s409 = smul.u32 2, %s30
        %s410 = smul.u32 2, %s30
        %p411 = scmp.lt.s32.totalorder %s29, 1
        %s412 = scalar_select %p411, %s29, 1
        %p413 = scmp.lt.s32.totalorder %s410, 1
        %s414 = scalar_select %p413, %s410, 1
        %s415 = smul.addr %s412, 2
        %s416 = sadd.s32 %s414, %s415
        %s417 = smul.addr %s416, 4
        %s418 = scalar_lea.vmem %s1, %s417
        %s419 = smul.u32 2, %s30
        %p420 = scmp.lt.s32.totalorder %s29, 1
        %s421 = scalar_select %p420, %s29, 1
        %p422 = scmp.lt.s32.totalorder %s30, 0
        %s423 = scalar_select %p422, %s30, 0
        %s424 = sadd.s32 %s423, %s421
        %s425 = smul.addr %s424, 4
        %s426 = scalar_lea.vmem %s2, %s425
        %s427 = smul.u32 2, %s30
        %v429 = vld [vmem:[%s408] sm:$0xff]
        %v430 = vld [vmem:[%s3] sm:$0xf]
        %v431 = vld [vmem:[%s3 + $0x4] sm:$0xf]
        %v432 = vld [vmem:[%s3 + $0x8] sm:$0xf]
        %v433 = vld [vmem:[%s3 + $0xc] sm:$0xf]
        %v435 = vcombine.high %v429, %v429
        %v437 = vpack.c.bf16 %v429, %v429
        %v438 = vpack.c.bf16 %v435, %v435
        %v439 = vld [vmem:[%s4] sm:$0xf]
        %v440 = vld [vmem:[%s4 + $0x4] sm:$0xf]
        %v441 = vld [vmem:[%s4 + $0x8] sm:$0xf]
        %v442 = vld [vmem:[%s4 + $0xc] sm:$0xf]
        %v443 = vld [vmem:[%s418] sm:$0xff]
        %v445 = vcombine.high %v443, %v443
        %v447 = vpack.c.bf16 %v443, %v443
        %v448 = vpack.c.bf16 %v445, %v445
        %v453 = vunpack.c.l.b16 %v439
        %v454 = vunpack.c.l.b16 %v440
        %v455 = vunpack.c.l.b16 %v441
        %v456 = vunpack.c.l.b16 %v442
        %v457 = vpack.c.b16 %v454, %v453
        %v458 = vpack.c.b16 %v456, %v455
        %vm459 = vcmask 31744
        %v461 = vsel %vm459, %v457, 0
        %v464 = vsel %vm459, %v458, 0
        %vm466 = vcmask 1041408
        %v468 = vsel %vm466, %v447, 0
        %v471 = vsel %vm466, %v448, 0
        %473 = vmatprep.subr.bf16.mxu0 %v471
        %474 = vmatpush1.bf16.msra.mxu0 %v468
        %475 = vmatprep.subr.bf16.mxu0 0
        %476 = vmatpush1.bf16.msra.mxu0 0
        %477 = vmatprep.subr.bf16.mxu0 0
        %478 = vmatpush1.bf16.msra.mxu0 0
        %479 = vmatprep.subr.bf16.mxu0 0
        %480 = vmatpush1.bf16.msra.mxu0 0
        %481 = vmatprep.subr.bf16.mxu0 0
        %482 = vmatpush1.bf16.msra.mxu0 0
        %483 = vmatprep.subr.bf16.mxu0 0
        %484 = vmatpush1.bf16.msra.mxu0 0
        %485 = vmatprep.subr.bf16.mxu0 0
        %486 = vmatpush1.bf16.msra.mxu0 0
        %487 = vmatprep.subr.bf16.mxu0 0
        %488 = vmatpush1.bf16.msra.mxu0 0
        %489 = vmatprep.subr.bf16.mxu0 0
        %490 = vmatpush1.bf16.msra.mxu0 0
        %491 = vmatprep.subr.bf16.mxu0 0
        %492 = vmatpush1.bf16.msra.mxu0 0
        %493 = vmatprep.subr.bf16.mxu0 0
        %494 = vmatpush1.bf16.msra.mxu0 0
        %495 = vmatprep.subr.bf16.mxu0 0
        %496 = vmatpush1.bf16.msra.mxu0 0
        %497 = vmatprep.subr.bf16.mxu0 0
        %498 = vmatpush1.bf16.msra.mxu0 0
        %499 = vmatprep.subr.bf16.mxu0 0
        %500 = vmatpush1.bf16.msra.mxu0 0
        %501 = vmatprep.subr.bf16.mxu0 0
        %502 = vmatpush1.bf16.msra.mxu0 0
        %503 = vmatprep.subr.bf16.mxu0 0
        %504 = vmatpush1.bf16.msra.mxu0 0
        %505 = vmatprep.mubr.bf16.mxu0 0
        %506 = vmatmul.mubr.bf16.gmra.mrb[0].mxu0 %v461
        %v507 = vpop.f32.mrb[0].mxu0
        %v508 = vadd.f32 0.0, %v507
        %v509 = vpop.f32.mrb[0].mxu0
        %v510 = vadd.f32 0.0, %v509
        %v511 = vpop.f32.mrb[0].mxu0
        %v512 = vadd.f32 0.0, %v511
        %v513 = vpop.f32.mrb[0].mxu0
        %v514 = vadd.f32 0.0, %v513
        %515 = vmatprep.mubr.bf16.mxu0 0
        %516 = vmatmul.mubr.bf16.gmra.mrb[0].mxu0 %v464
        %v517 = vpop.f32.mrb[0].mxu0
        %v518 = vadd.f32 0.0, %v517
        %v519 = vpop.f32.mrb[0].mxu0
        %v520 = vadd.f32 0.0, %v519
        %v521 = vpop.f32.mrb[0].mxu0
        %v522 = vadd.f32 0.0, %v521
        %v523 = vpop.f32.mrb[0].mxu0
        %v524 = vadd.f32 0.0, %v523
        %525 = vdwg.mxu0
        %v530 = vunpack.c.l.b16 %v430
        %v531 = vunpack.c.l.b16 %v431
        %v532 = vunpack.c.l.b16 %v432
        %v533 = vunpack.c.l.b16 %v433
        %v534 = vpack.c.b16 %v531, %v530
        %v535 = vpack.c.b16 %v533, %v532
        %v537 = vsel %vm459, %v534, 0
        %v540 = vsel %vm459, %v535, 0
        %v543 = vsel %vm466, %v437, 0
        %v546 = vsel %vm466, %v438, 0
        %548 = vmatprep.subr.bf16.mxu0 %v546
        %549 = vmatpush1.bf16.msra.mxu0 %v543
        %550 = vmatprep.subr.bf16.mxu0 0
        %551 = vmatpush1.bf16.msra.mxu0 0
        %552 = vmatprep.subr.bf16.mxu0 0
        %553 = vmatpush1.bf16.msra.mxu0 0
        %554 = vmatprep.subr.bf16.mxu0 0
        %555 = vmatpush1.bf16.msra.mxu0 0
        %556 = vmatprep.subr.bf16.mxu0 0
        %557 = vmatpush1.bf16.msra.mxu0 0
        %558 = vmatprep.subr.bf16.mxu0 0
        %559 = vmatpush1.bf16.msra.mxu0 0
        %560 = vmatprep.subr.bf16.mxu0 0
        %561 = vmatpush1.bf16.msra.mxu0 0
        %562 = vmatprep.subr.bf16.mxu0 0
        %563 = vmatpush1.bf16.msra.mxu0 0
        %564 = vmatprep.subr.bf16.mxu0 0
        %565 = vmatpush1.bf16.msra.mxu0 0
        %566 = vmatprep.subr.bf16.mxu0 0
        %567 = vmatpush1.bf16.msra.mxu0 0
        %568 = vmatprep.subr.bf16.mxu0 0
        %569 = vmatpush1.bf16.msra.mxu0 0
        %570 = vmatprep.subr.bf16.mxu0 0
        %571 = vmatpush1.bf16.msra.mxu0 0
        %572 = vmatprep.subr.bf16.mxu0 0
        %573 = vmatpush1.bf16.msra.mxu0 0
        %574 = vmatprep.subr.bf16.mxu0 0
        %575 = vmatpush1.bf16.msra.mxu0 0
        %576 = vmatprep.subr.bf16.mxu0 0
        %577 = vmatpush1.bf16.msra.mxu0 0
        %578 = vmatprep.subr.bf16.mxu0 0
        %579 = vmatpush1.bf16.msra.mxu0 0
        %580 = vmatprep.mubr.bf16.mxu0 0
        %581 = vmatmul.mubr.bf16.gmra.mrb[0].mxu0 %v537
        %v582 = vpop.f32.mrb[0].mxu0
        %v583 = vadd.f32 %v508, %v582
        %v584 = vpop.f32.mrb[0].mxu0
        %v585 = vadd.f32 %v510, %v584
        %v586 = vpop.f32.mrb[0].mxu0
        %v587 = vadd.f32 %v512, %v586
        %v588 = vpop.f32.mrb[0].mxu0
        %v589 = vadd.f32 %v514, %v588
        %590 = vmatprep.mubr.bf16.mxu0 0
        %591 = vmatmul.mubr.bf16.gmra.mrb[0].mxu0 %v540
        %v592 = vpop.f32.mrb[0].mxu0
        %v593 = vadd.f32 %v518, %v592
        %v594 = vpop.f32.mrb[0].mxu0
        %v595 = vadd.f32 %v520, %v594
        %v596 = vpop.f32.mrb[0].mxu0
        %v597 = vadd.f32 %v522, %v596
        %v598 = vpop.f32.mrb[0].mxu0
        %v599 = vadd.f32 %v524, %v598
        %600 = vdwg.mxu0
        %v601 = vld [vmem:[%s5] sm:$0xf]
        %v602 = vld [vmem:[%s5 + $0x4] sm:$0xf]
        %v603 = vld [vmem:[%s5 + $0x8] sm:$0xf]
        %v604 = vld [vmem:[%s5 + $0xc] sm:$0xf]
        %v605 = vld [vmem:[%s426] sm:$0xf]
        %v606 = vpack.c.bf16 %v605, %v605
        %v611 = vunpack.c.l.b16 %v601
        %v612 = vunpack.c.l.b16 %v602
        %v613 = vunpack.c.l.b16 %v603
        %v614 = vunpack.c.l.b16 %v604
        %v615 = vpack.c.b16 %v612, %v611
        %v616 = vpack.c.b16 %v614, %v613
        %v618 = vsel %vm459, %v615, 0
        %v621 = vsel %vm459, %v616, 0
        %v624 = vsel %vm466, %v606, 0
        %626 = vmatprep.subr.bf16.mxu0 0
        %627 = vmatpush1.bf16.msra.mxu0 %v624
        %628 = vmatprep.subr.bf16.mxu0 0
        %629 = vmatpush1.bf16.msra.mxu0 0
        %630 = vmatprep.subr.bf16.mxu0 0
        %631 = vmatpush1.bf16.msra.mxu0 0
        %632 = vmatprep.subr.bf16.mxu0 0
        %633 = vmatpush1.bf16.msra.mxu0 0
        %634 = vmatprep.subr.bf16.mxu0 0
        %635 = vmatpush1.bf16.msra.mxu0 0
        %636 = vmatprep.subr.bf16.mxu0 0
        %637 = vmatpush1.bf16.msra.mxu0 0
        %638 = vmatprep.subr.bf16.mxu0 0
        %639 = vmatpush1.bf16.msra.mxu0 0
        %640 = vmatprep.subr.bf16.mxu0 0
        %641 = vmatpush1.bf16.msra.mxu0 0
        %642 = vmatprep.subr.bf16.mxu0 0
        %643 = vmatpush1.bf16.msra.mxu0 0
        %644 = vmatprep.subr.bf16.mxu0 0
        %645 = vmatpush1.bf16.msra.mxu0 0
        %646 = vmatprep.subr.bf16.mxu0 0
        %647 = vmatpush1.bf16.msra.mxu0 0
        %648 = vmatprep.subr.bf16.mxu0 0
        %649 = vmatpush1.bf16.msra.mxu0 0
        %650 = vmatprep.subr.bf16.mxu0 0
        %651 = vmatpush1.bf16.msra.mxu0 0
        %652 = vmatprep.subr.bf16.mxu0 0
        %653 = vmatpush1.bf16.msra.mxu0 0
        %654 = vmatprep.subr.bf16.mxu0 0
        %655 = vmatpush1.bf16.msra.mxu0 0
        %656 = vmatprep.subr.bf16.mxu0 0
        %657 = vmatpush1.bf16.msra.mxu0 0
        %658 = vmatprep.mubr.bf16.mxu0 0
        %659 = vmatmul.mubr.bf16.gmra.mrb[0].mxu0 %v618
        %v660 = vpop.f32.mrb[0].mxu0
        %v661 = vadd.f32 0.0, %v660
        %v662 = vpop.f32.mrb[0].mxu0
        %v663 = vpop.f32.mrb[0].mxu0
        %v664 = vadd.f32 0.0, %v663
        %v665 = vpop.f32.mrb[0].mxu0
        %666 = vmatprep.mubr.bf16.mxu0 0
        %667 = vmatmul.mubr.bf16.gmra.mrb[0].mxu0 %v621
        %v668 = vpop.f32.mrb[0].mxu0
        %v669 = vadd.f32 0.0, %v668
        %v670 = vpop.f32.mrb[0].mxu0
        %v671 = vpop.f32.mrb[0].mxu0
        %v672 = vadd.f32 0.0, %v671
        %v673 = vpop.f32.mrb[0].mxu0
        %674 = vdwg.mxu0
        %679 = vrot.lane.b32.xlu0 %v661, 16
        %v680 = vpop.permute.xlu0 %679
        %681 = vrot.lane.b32.xlu0 %v664, 16
        %v682 = vpop.permute.xlu0 %681
        %683 = vrot.lane.b32.xlu0 %v669, 16
        %v684 = vpop.permute.xlu0 %683
        %685 = vrot.lane.b32.xlu0 %v672, 16
        %v686 = vpop.permute.xlu0 %685
        %691 = vrot.lane.b32.xlu0 %v661, 32
        %v692 = vpop.permute.xlu0 %691
        %693 = vrot.lane.b32.xlu0 %v664, 32
        %v694 = vpop.permute.xlu0 %693
        %695 = vrot.lane.b32.xlu0 %v669, 32
        %v696 = vpop.permute.xlu0 %695
        %697 = vrot.lane.b32.xlu0 %v672, 32
        %v698 = vpop.permute.xlu0 %697
        %703 = vrot.lane.b32.xlu0 %v661, 48
        %v704 = vpop.permute.xlu0 %703
        %705 = vrot.lane.b32.xlu0 %v664, 48
        %v706 = vpop.permute.xlu0 %705
        %707 = vrot.lane.b32.xlu0 %v669, 48
        %v708 = vpop.permute.xlu0 %707
        %709 = vrot.lane.b32.xlu0 %v672, 48
        %v710 = vpop.permute.xlu0 %709
        %715 = vrot.lane.b32.xlu0 %v661, 64
        %v716 = vpop.permute.xlu0 %715
        %717 = vrot.lane.b32.xlu0 %v664, 64
        %v718 = vpop.permute.xlu0 %717
        %719 = vrot.lane.b32.xlu0 %v669, 64
        %v720 = vpop.permute.xlu0 %719
        %721 = vrot.lane.b32.xlu0 %v672, 64
        %v722 = vpop.permute.xlu0 %721
        %727 = vrot.lane.b32.xlu0 %v661, 80
        %v728 = vpop.permute.xlu0 %727
        %729 = vrot.lane.b32.xlu0 %v664, 80
        %v730 = vpop.permute.xlu0 %729
        %731 = vrot.lane.b32.xlu0 %v669, 80
        %v732 = vpop.permute.xlu0 %731
        %733 = vrot.lane.b32.xlu0 %v672, 80
        %v734 = vpop.permute.xlu0 %733
        %739 = vrot.lane.b32.xlu0 %v661, 96
        %v740 = vpop.permute.xlu0 %739
        %741 = vrot.lane.b32.xlu0 %v664, 96
        %v742 = vpop.permute.xlu0 %741
        %743 = vrot.lane.b32.xlu0 %v669, 96
        %v744 = vpop.permute.xlu0 %743
        %745 = vrot.lane.b32.xlu0 %v672, 96
        %v746 = vpop.permute.xlu0 %745
        %751 = vrot.lane.b32.xlu0 %v661, 112
        %v752 = vpop.permute.xlu0 %751
        %753 = vrot.lane.b32.xlu0 %v664, 112
        %v754 = vpop.permute.xlu0 %753
        %755 = vrot.lane.b32.xlu0 %v669, 112
        %v756 = vpop.permute.xlu0 %755
        %757 = vrot.lane.b32.xlu0 %v672, 112
        %v758 = vpop.permute.xlu0 %757
        %vm763 = vcmask 130048
        %v764 = vsel %vm763, %v661, %v680
        %v765 = vsel %vm763, %v664, %v682
        %v766 = vsel %vm763, %v669, %v684
        %v767 = vsel %vm763, %v672, %v686
        %vm768 = vcmask 261120
        %v769 = vsel %vm768, %v764, %v680
        %v770 = vsel %vm768, %v765, %v682
        %v771 = vsel %vm768, %v766, %v684
        %v772 = vsel %vm768, %v767, %v686
        %vm773 = vcmask 392192
        %v774 = vsel %vm773, %v769, %v692
        %v775 = vsel %vm773, %v770, %v694
        %v776 = vsel %vm773, %v771, %v696
        %v777 = vsel %vm773, %v772, %v698
        %vm778 = vcmask 523264
        %v779 = vsel %vm778, %v774, %v692
        %v780 = vsel %vm778, %v775, %v694
        %v781 = vsel %vm778, %v776, %v696
        %v782 = vsel %vm778, %v777, %v698
        %vm783 = vcmask 654336
        %v784 = vsel %vm783, %v779, %v704
        %v785 = vsel %vm783, %v780, %v706
        %v786 = vsel %vm783, %v781, %v708
        %v787 = vsel %vm783, %v782, %v710
        %vm788 = vcmask 785408
        %v789 = vsel %vm788, %v784, %v704
        %v790 = vsel %vm788, %v785, %v706
        %v791 = vsel %vm788, %v786, %v708
        %v792 = vsel %vm788, %v787, %v710
        %vm793 = vcmask 916480
        %v794 = vsel %vm793, %v789, %v716
        %v795 = vsel %vm793, %v790, %v718
        %v796 = vsel %vm793, %v791, %v720
        %v797 = vsel %vm793, %v792, %v722
        %v798 = vsel %vm763, %v716, %v728
        %v799 = vsel %vm763, %v718, %v730
        %v800 = vsel %vm763, %v720, %v732
        %v801 = vsel %vm763, %v722, %v734
        %v802 = vsel %vm768, %v798, %v728
        %v803 = vsel %vm768, %v799, %v730
        %v804 = vsel %vm768, %v800, %v732
        %v805 = vsel %vm768, %v801, %v734
        %v806 = vsel %vm773, %v802, %v740
        %v807 = vsel %vm773, %v803, %v742
        %v808 = vsel %vm773, %v804, %v744
        %v809 = vsel %vm773, %v805, %v746
        %v810 = vsel %vm778, %v806, %v740
        %v811 = vsel %vm778, %v807, %v742
        %v812 = vsel %vm778, %v808, %v744
        %v813 = vsel %vm778, %v809, %v746
        %v814 = vsel %vm783, %v810, %v752
        %v815 = vsel %vm783, %v811, %v754
        %v816 = vsel %vm783, %v812, %v756
        %v817 = vsel %vm783, %v813, %v758
        %v818 = vsel %vm788, %v814, %v752
        %v819 = vsel %vm788, %v815, %v754
        %v820 = vsel %vm788, %v816, %v756
        %v821 = vsel %vm788, %v817, %v758
        %v822 = vsel %vm793, %v818, %v661
        %v823 = vsel %vm793, %v819, %v664
        %v824 = vsel %vm793, %v820, %v669
        %v825 = vsel %vm793, %v821, %v672
        %v826 = vadd.f32 %v583, %v794
        %v827 = vadd.f32 %v585, %v822
        %v828 = vadd.f32 %v587, %v795
        %v829 = vadd.f32 %v589, %v823
        %v830 = vadd.f32 %v593, %v796
        %v831 = vadd.f32 %v595, %v824
        %v832 = vadd.f32 %v597, %v797
        %v833 = vadd.f32 %v599, %v825
        %v834 = vld [vmem:[%s6] sm:$0xff]
        %v835 = vld [vmem:[%s6 + $0x8] sm:$0xff]
        %v836 = vld [vmem:[%s6 + $0x10] sm:$0xff]
        %v837 = vld [vmem:[%s6 + $0x18] sm:$0xff]
        %839 = vset.pattern.permute.xlu0 0
        %840 = vperm.xlu0 %839, %v834
        %v841 = vpop.permute.xlu0 %840
        %844 = vset.pattern.permute.xlu0 0
        %845 = vperm.xlu0 %844, %v835
        %v846 = vpop.permute.xlu0 %845
        %849 = vset.pattern.permute.xlu0 0
        %850 = vperm.xlu0 %849, %v836
        %v851 = vpop.permute.xlu0 %850
        %854 = vset.pattern.permute.xlu0 0
        %855 = vperm.xlu0 %854, %v837
        %v856 = vpop.permute.xlu0 %855
        %v858 = vadd.f32 %v826, %v841
        %v859 = vadd.f32 %v827, %v841
        %v860 = vadd.f32 %v828, %v846
        %v861 = vadd.f32 %v829, %v846
        %v862 = vadd.f32 %v830, %v851
        %v863 = vadd.f32 %v831, %v851
        %v864 = vadd.f32 %v832, %v856
        %v865 = vadd.f32 %v833, %v856
        %v866 = vmax.f32 %v858, 0.0
        %v867 = vmax.f32 %v859, 0.0
        %v868 = vmax.f32 %v860, 0.0
        %v869 = vmax.f32 %v861, 0.0
        %v870 = vmax.f32 %v862, 0.0
        %v871 = vmax.f32 %v863, 0.0
        %v872 = vmax.f32 %v864, 0.0
        %v873 = vmax.f32 %v865, 0.0
        %v874 = vld [vmem:[%s7] sm:$0x1]
        %v875 = vpack.c.bf16 %v868, %v866
        %v876 = vpack.c.bf16 %v869, %v867
        %v877 = vpack.c.bf16 %v872, %v870
        %v878 = vpack.c.bf16 %v873, %v871
        %v879 = vld [vmem:[#allocation2] sm:$0x1]
        %881 = vset.pattern.permute.xlu0 0
        %882 = vperm.xlu0 %881, %v879
        %v883 = vpop.permute.xlu0 %882
        %v885 = vlaneseq
        %v886 = vshrl.u32 %v885, 7
        %v887 = vsub.s32 0, %v886
        %v888 = vrot.slane %v883, %v887
        %v890 = vsel %vm768, %v874, 0
        %892 = vmatprep.subr.bf16.mxu0 %v876
        %893 = vmatpush1.bf16.msra.mxu0 %v875
        %894 = vmatprep.subr.bf16.mxu0 %v878
        %895 = vmatpush1.bf16.msra.mxu0 %v877
        %896 = vmatprep.subr.bf16.mxu0 0
        %897 = vmatpush1.bf16.msra.mxu0 0
        %898 = vmatprep.subr.bf16.mxu0 0
        %899 = vmatpush1.bf16.msra.mxu0 0
        %900 = vmatprep.subr.bf16.mxu0 0
        %901 = vmatpush1.bf16.msra.mxu0 0
        %902 = vmatprep.subr.bf16.mxu0 0
        %903 = vmatpush1.bf16.msra.mxu0 0
        %904 = vmatprep.subr.bf16.mxu0 0
        %905 = vmatpush1.bf16.msra.mxu0 0
        %906 = vmatprep.subr.bf16.mxu0 0
        %907 = vmatpush1.bf16.msra.mxu0 0
        %908 = vmatprep.subr.bf16.mxu0 0
        %909 = vmatpush1.bf16.msra.mxu0 0
        %910 = vmatprep.subr.bf16.mxu0 0
        %911 = vmatpush1.bf16.msra.mxu0 0
        %912 = vmatprep.subr.bf16.mxu0 0
        %913 = vmatpush1.bf16.msra.mxu0 0
        %914 = vmatprep.subr.bf16.mxu0 0
        %915 = vmatpush1.bf16.msra.mxu0 0
        %916 = vmatprep.subr.bf16.mxu0 0
        %917 = vmatpush1.bf16.msra.mxu0 0
        %918 = vmatprep.subr.bf16.mxu0 0
        %919 = vmatpush1.bf16.msra.mxu0 0
        %920 = vmatprep.subr.bf16.mxu0 0
        %921 = vmatpush1.bf16.msra.mxu0 0
        %922 = vmatprep.subr.bf16.mxu0 0
        %923 = vmatpush1.bf16.msra.mxu0 0
        %924 = vmatprep.mubr.bf16.mxu0 0
        %925 = vmatmul.mubr.bf16.gmra.mrb[0].mxu0 %v890
        %v926 = vpop.f32.mrb[0].mxu0
        %v927 = vadd.f32 %v888, %v926
        %v928 = vpop.f32.mrb[0].mxu0
        %v929 = vadd.f32 %v888, %v928
        %v930 = vpop.f32.mrb[0].mxu0
        %v931 = vpop.f32.mrb[0].mxu0
        %932 = vdwg.mxu0
        %v933 = vsub.f32 0.0, %v927
        %v934 = vsub.f32 0.0, %v929
        %v935 = vmul.f32 %v933, 1.442695
        %v936 = vpow.pop %v935
        %v937 = vmul.f32 %v934, 1.442695
        %v938 = vpow.pop %v937
        %v939 = vadd.f32 %v936, 1.0
        %v940 = vadd.f32 %v938, 1.0
        %v941 = vrcp.pop %v939
        %v942 = vmul.f32 1.0, %v941
        %v943 = vrcp.pop %v940
        %v944 = vmul.f32 1.0, %v943
        %v945 = vlaneseq
        %v946 = vshrl.u32 %v945, 7
        %v947 = vsub.s32 0, %v946
        %v948 = vrot.slane %v942, %v947
        %v949 = vlaneseq
        %v950 = vshrl.u32 %v949, 7
        %v951 = vsub.s32 0, %v950
        %v952 = vrot.slane %v944, %v951
        %v955 = vcombine.low %v948, %v952
        %v957 = vmul.f32 %v429, %v955
        %958 = vst [vmem:[%s399] sm:$0xff] %v957
        %s959 = sand.u32 %s257, 1
        %s960 = scalar_lea.sflag [#allocation4], %s959
        %s961 = sand.u32 %s257, 1
        %s962 = smul.addr %s961, 8
        %s963 = scalar_lea.vmem [#allocation3], %s962
        // Predicated region
        $region57: #{tpu_custom_call.1} parent=55 // pred_check
          %p964 = pneg %p267
        $region58: #{tpu_custom_call.1} parent=55 // pred_check_branch
          %966 = sbr.rel (%p964) target = $region60
        $region59: #{tpu_custom_call.1} parent=55 // pred_region
          %s967 = smul.u32 2, %s30
          %s969 = ssub.s32 128, 128
          %970 = vsyncadd %s960, %s969
          %s971 = smul.addr %s29, 2
          %s972 = sadd.s32 %s967, %s971
          %s973 = smul.addr %s972, 64
          %s974 = scalar_lea.hbm %s9, %s973
          %s976 = sshll.u32 %s963, 4
          %s977 = int_to_ptr.vmem [resolvable:$true] %s976
          %979 = dma.vmem_to_hbm [thread:$0]  %s977, 128, %s974, %s960
        $region60: #{tpu_custom_call.1} parent=55 // pred_fallthru
          _
      $region56: #{tpu_custom_call.1} parent=5 // pred_fallthru
        _
      %p980 = scmp.le.s32.totalorder 2, %s20
      // Predicated region
      $region61: #{tpu_custom_call.1} parent=5 // pred_check
        %p981 = pneg %p980
      $region62: #{tpu_custom_call.1} parent=5 // pred_check_branch
        %983 = sbr.rel (%p981) target = $region64
      $region63: #{tpu_custom_call.1} parent=5 // pred_region
        %s984 = ssub.s32 %s20, 2
        // Predicated region
        $region65: #{tpu_custom_call.1} parent=63 // pred_check
          %p985 = pneg %p273
        $region66: #{tpu_custom_call.1} parent=63 // pred_check_branch
          %987 = sbr.rel (%p985) target = $region68
        $region67: #{tpu_custom_call.1} parent=63 // pred_region
          %s988 = sand.u32 %s258, 1
          %s989 = scalar_lea.sflag [#allocation4], %s988
          %s990 = sand.u32 %s258, 1
          %s991 = smul.addr %s990, 8
          %s992 = scalar_lea.vmem [#allocation3], %s991
          %993 = dma.done %s989, 128
        $region68: #{tpu_custom_call.1} parent=63 // pred_fallthru
          _
      $region64: #{tpu_custom_call.1} parent=5 // pred_fallthru
        _
    $region6: #{tpu_custom_call.1} parent=1 // loop_footer
      %s24 = sadd.s32 1, %s20
    $region7: #{tpu_custom_call.1} parent=1 // loop_footer_branch
      %19 = sbr.rel target = $region3
    $region8: #{tpu_custom_call.1} parent=1 // loop_exit
      _
    %994 = vsyncpa [#allocation4], 1
    %s995 = scalar_lea.sflag [#allocation4], 1
    %996 = vsyncpa %s995, 1

</llo_original>
